<compile_context>
chip_gen: v5e
topology: v5e:2x2
jax: 0.10.0
libtpu: 0.0.40
codegen_flags: <defaults>
</compile_context>

<pallas_src>
import functools

import jax
import jax.numpy as jnp
from jax.experimental import pallas as pl
from jax.experimental.pallas import tpu as pltpu


def _crossnet_kernel(x0_ref, w_ref, b_ref, out_ref, xi_ref, *, weights_resident):
    # x0_ref:  (TB, D)            batch tile of X_0 (input dtype)
    # w_ref:   (L, D, D)|(1, D, D) bf16 weights, layout (in, out) [pre-transposed]
    # b_ref:   (L, 1, D)|(1, 1, D) f32 biases
    # out_ref: (TB, D)            output tile (written on the last layer only)
    # xi_ref:  (TB, D) f32        VMEM carry of X_i across the layer grid axis
    l = pl.program_id(1)
    x0 = x0_ref[...].astype(jnp.float32)

    @pl.when(l == 0)
    def _init():
        xi_ref[...] = x0

    xi = xi_ref[...]  # (TB, D) f32

    if weights_resident:
        w = w_ref[l]                          # (D, D) bf16, dynamic first-axis index
        b = b_ref[l].astype(jnp.float32)      # (1, D)
    else:
        w = w_ref[0]                          # (D, D) bf16, this layer's streamed block
        b = b_ref[0].astype(jnp.float32)      # (1, D)

    # Linear_l(X_i) = X_i @ W.T + b ; W was pre-transposed to (in, out) so this is the
    # canonical MXU contraction: bf16 operands, f32 accumulation.
    h = jnp.dot(xi.astype(w.dtype), w, preferred_element_type=jnp.float32) + b

    xi_new = xi + x0 * h                      # VPU, f32
    xi_ref[...] = xi_new

    @pl.when(l == pl.num_programs(1) - 1)
    def _store():
        out_ref[...] = xi_new.astype(out_ref.dtype)


def crossnet_v2(x0, weights, biases, *, block_batch=256, weights_resident=None,
                interpret=False):
    """x0: (B, D); weights: (L, D, D) PyTorch-layout (out, in); biases: (L, D)."""
    B, D = x0.shape
    L = weights.shape[0]
    assert weights.shape == (L, D, D), "CrossNetV2 weights must be (L, D, D)"
    assert biases.shape == (L, D), "CrossNetV2 biases must be (L, D)"
    if L == 0:
        return x0

    # Lane padding: last dim a multiple of 128 -> full vregs, unmasked vst.
    D_pad = -(-D // 128) * 128
    # Batch tiling: sublane-aligned tile; pad batch to a whole number of tiles so
    # there are no ragged tiles (zero-padded rows compute zeros and are sliced off).
    tb = min(block_batch, -(-B // 8) * 8)
    tb = -(-tb // 8) * 8
    B_pad = -(-B // tb) * tb

    x0_p = x0
    if (B_pad, D_pad) != (B, D):
        x0_p = jnp.pad(x0, ((0, B_pad - B), (0, D_pad - D)))
    w_p, b_p = weights, biases
    if D_pad != D:
        w_p = jnp.pad(weights, ((0, 0), (0, D_pad - D), (0, D_pad - D)))
        b_p = jnp.pad(biases, ((0, 0), (0, D_pad - D)))

    # PyTorch Linear weight is (out, in); transpose ONCE in the wrapper so the kernel
    # contracts in (m,k)x(k,n) form. bf16 feeds the MXU at full rate; bias stays f32.
    # TODO(synk): cache w_bf16 / b_f32 outside the jit'd hot path when weights are static.
    w_bf16 = jnp.swapaxes(w_p, 1, 2).astype(jnp.bfloat16)      # (L, D_in, D_out)
    b_f32 = b_p.reshape(L, 1, D_pad).astype(jnp.float32)       # (L, 1, D)

    in_size = jnp.dtype(x0.dtype).itemsize
    n_tiles = B_pad // tb
    w_bytes_per_layer = D_pad * D_pad * 2

    if weights_resident is None:
        # Keep all layer weights resident in VMEM (fetched once for the whole grid,
        # not re-streamed per batch tile) when they comfortably fit.
        weights_resident = (L * w_bytes_per_layer) <= (12 << 20)

    if weights_resident:
        w_spec = pl.BlockSpec((L, D_pad, D_pad), lambda i, l: (0, 0, 0))
        b_spec = pl.BlockSpec((L, 1, D_pad), lambda i, l: (0, 0, 0))
        w_vmem = 2 * L * w_bytes_per_layer     # headroom if still double-buffered
        b_vmem = 2 * L * D_pad * 4
        w_hbm = L * w_bytes_per_layer          # weights read once
    else:
        w_spec = pl.BlockSpec((1, D_pad, D_pad), lambda i, l: (l, 0, 0))
        b_spec = pl.BlockSpec((1, 1, D_pad), lambda i, l: (l, 0, 0))
        w_vmem = 2 * w_bytes_per_layer         # one layer, double-buffered
        b_vmem = 2 * D_pad * 4
        w_hbm = n_tiles * L * w_bytes_per_layer  # re-streamed per batch tile

    vmem_limit = int(
        2 * tb * D_pad * in_size        # X_0 tile (double-buffered)
        + 2 * tb * D_pad * in_size      # output tile (double-buffered)
        + w_vmem + b_vmem               # weights / biases
        + tb * D_pad * 4                # xi VMEM carry
        + 4 * tb * D_pad * 4            # f32 live temporaries headroom
        + (4 << 20)                     # slack
    )
    vmem_limit = min(max(vmem_limit, 16 << 20), 64 << 20)

    cost = pl.CostEstimate(
        flops=2 * L * B_pad * D_pad * D_pad + 3 * L * B_pad * D_pad,
        transcendentals=0,
        bytes_accessed=(2 * B_pad * D_pad * in_size + w_hbm + L * D_pad * 4),
    )

    kernel = functools.partial(_crossnet_kernel, weights_resident=weights_resident)

    out = pl.pallas_call(
        kernel,
        out_shape=jax.ShapeDtypeStruct((B_pad, D_pad), x0.dtype),
        grid_spec=pltpu.PrefetchScalarGridSpec(
            num_scalar_prefetch=0,
            grid=(n_tiles, L),
            in_specs=[
                pl.BlockSpec((tb, D_pad), lambda i, l: (i, 0)),   # X_0 batch tile
                w_spec,                                           # weights
                b_spec,                                           # biases
            ],
            out_specs=pl.BlockSpec((tb, D_pad), lambda i, l: (i, 0)),
            scratch_shapes=[pltpu.VMEM((tb, D_pad), jnp.float32)],
        ),
        compiler_params=pltpu.CompilerParams(
            dimension_semantics=("parallel", "arbitrary"),
            vmem_limit_bytes=vmem_limit,
        ),
        cost_estimate=cost,
        interpret=interpret,
    )(x0_p, w_bf16, b_f32)

    if (B_pad, D_pad) != (B, D):
        out = out[:B, :D]
    return out


def crossnet_v2_ref(x0, weights, biases):
    """Pure-JAX f32 reference matching the PyTorch forward exactly."""
    xi = x0
    for l in range(weights.shape[0]):
        h = xi @ weights[l].T + biases[l]
        xi = xi + x0 * h
    return xi


if __name__ == "__main__":
    key = jax.random.PRNGKey(0)
    B, D, L = 24, 32, 3   # batch, input_dim, num_layers (small demo shapes)

    k_x, k_w = jax.random.split(key)
    x0 = jax.random.normal(k_x, (B, D), dtype=jnp.float32)

    # Deterministic parameter init mirroring the module's _init_weight_:
    # xavier_normal_ on weight (std = sqrt(2 / (fan_in + fan_out))), zeros on bias.
    xavier_std = (2.0 / (D + D)) ** 0.5
    weights = jax.random.normal(k_w, (L, D, D), dtype=jnp.float32) * xavier_std
    biases = jnp.zeros((L, D), dtype=jnp.float32)

    ref = crossnet_v2_ref(x0, weights, biases)

    # Auto path: weights fully resident in VMEM at these sizes.
    # block_batch=8 so the tiny demo batch still exercises multiple grid steps.
    out = jax.block_until_ready(crossnet_v2(x0, weights, biases, block_batch=8))
    assert out.shape == (B, D)
    rel = float(jnp.max(jnp.abs(out - ref)) / (jnp.max(jnp.abs(ref)) + 1e-6))
    assert rel < 2e-2, f"resident-weight path mismatch vs reference, rel_err={rel}"

    # Streaming path (per-layer weight DMA) exercised explicitly.
    out_s = jax.block_until_ready(
        crossnet_v2(x0, weights, biases, block_batch=8, weights_resident=False))
    rel_s = float(jnp.max(jnp.abs(out_s - ref)) / (jnp.max(jnp.abs(ref)) + 1e-6))
    assert rel_s < 2e-2, f"streaming-weight path mismatch vs reference, rel_err={rel_s}"

    print("KERNEL_OK")
</pallas_src>

<mosaic_0001>
module attributes {stable_mosaic.version = 11 : i64} {
  func.func @_crossnet_kernel(%arg0: i32, %arg1: i32, %arg2: memref<8x128xf32, #tpu.memory_space<vmem>>, %arg3: memref<3x128x128xbf16, #tpu.memory_space<vmem>>, %arg4: memref<3x1x128xf32, #tpu.memory_space<vmem>>, %arg5: memref<8x128xf32, #tpu.memory_space<vmem>>, %arg6: memref<8x128xf32, #tpu.memory_space<vmem>>) attributes {dimension_semantics = [#tpu.dimension_semantics<parallel>, #tpu.dimension_semantics<arbitrary>], iteration_bounds = array<i64: 3, 3>, scalar_prefetch = 0 : i64, scratch_operands = 1 : i64, tpu.core_type = #tpu.core_type<tc>, window_params = [{transform_indices = @transform_0, window_bounds = array<i64: 8, 128>}, {pipeline_mode = #tpu.pipeline_mode<synchronous>, transform_indices = @transform_1, window_bounds = array<i64: 3, 128, 128>}, {pipeline_mode = #tpu.pipeline_mode<synchronous>, transform_indices = @transform_2, window_bounds = array<i64: 3, 1, 128>}, {transform_indices = @transform_3, window_bounds = array<i64: 8, 128>}]} {
    %c0 = arith.constant 0 : index
    %c0_0 = arith.constant 0 : index
    %0 = vector.load %arg2[%c0, %c0_0] : memref<8x128xf32, #tpu.memory_space<vmem>>, vector<8x128xf32>
    %c0_i32 = arith.constant 0 : i32
    %1 = arith.cmpi eq, %arg1, %c0_i32 : i32
    %2 = arith.extui %1 : i1 to i32
    %c0_i32_1 = arith.constant 0 : i32
    %3 = arith.cmpi ne, %2, %c0_i32_1 : i32
    scf.if %3 {
      %c0_11 = arith.constant 0 : index
      %c0_12 = arith.constant 0 : index
      %21 = vector.load %arg6[%c0_11, %c0_12] : memref<8x128xf32, #tpu.memory_space<vmem>>, vector<8x128xf32>
      tpu.vector_store %arg6[%c0_11, %c0_12], %0 {strides = array<i32>} : memref<8x128xf32, #tpu.memory_space<vmem>>, vector<8x128xf32>,
    } else {
    }
    %c0_2 = arith.constant 0 : index
    %c0_3 = arith.constant 0 : index
    %4 = vector.load %arg6[%c0_2, %c0_3] : memref<8x128xf32, #tpu.memory_space<vmem>>, vector<8x128xf32>
    %5 = arith.index_cast %arg1 : i32 to index
    %c0_4 = arith.constant 0 : index
    %c0_5 = arith.constant 0 : index
    %6 = vector.load %arg3[%5, %c0_4, %c0_5] : memref<3x128x128xbf16, #tpu.memory_space<vmem>>, vector<1x128x128xbf16>
    %7 = vector.shape_cast %6 : vector<1x128x128xbf16> to vector<128x128xbf16>
    %8 = arith.index_cast %arg1 : i32 to index
    %c0_6 = arith.constant 0 : index
    %c0_7 = arith.constant 0 : index
    %9 = vector.load %arg4[%8, %c0_6, %c0_7] : memref<3x1x128xf32, #tpu.memory_space<vmem>>, vector<1x1x128xf32>
    %10 = vector.shape_cast %9 : vector<1x1x128xf32> to vector<1x128xf32>
    %11 = arith.truncf %4 : vector<8x128xf32> to vector<8x128xbf16>
    %cst = arith.constant dense<0.000000e+00> : vector<8x128xf32>
    %12 = tpu.matmul %11, %7, %cst {dimension_numbers = #tpu.dot_dimension_numbers<[1], [0], [0], [1], [0, 0, 1, 1], [], []>} : vector<8x128xbf16>, vector<128x128xbf16>, vector<8x128xf32> -> vector<8x128xf32>
    %13 = vector.broadcast %10 : vector<1x128xf32> to vector<8x128xf32>
    %14 = arith.addf %12, %13 : vector<8x128xf32>
    %15 = arith.mulf %0, %14 : vector<8x128xf32>
    %16 = arith.addf %4, %15 : vector<8x128xf32>
    %c0_8 = arith.constant 0 : index
    %c0_9 = arith.constant 0 : index
    %17 = vector.load %arg6[%c0_8, %c0_9] : memref<8x128xf32, #tpu.memory_space<vmem>>, vector<8x128xf32>
    tpu.vector_store %arg6[%c0_8, %c0_9], %16 {strides = array<i32>} : memref<8x128xf32, #tpu.memory_space<vmem>>, vector<8x128xf32>,
    %c2_i32 = arith.constant 2 : i32
    %18 = arith.cmpi eq, %arg1, %c2_i32 : i32
    %19 = arith.extui %18 : i1 to i32
    %c0_i32_10 = arith.constant 0 : i32
    %20 = arith.cmpi ne, %19, %c0_i32_10 : i32
    scf.if %20 {
      %c0_11 = arith.constant 0 : index
      %c0_12 = arith.constant 0 : index
      %21 = vector.load %arg5[%c0_11, %c0_12] : memref<8x128xf32, #tpu.memory_space<vmem>>, vector<8x128xf32>
      tpu.vector_store %arg5[%c0_11, %c0_12], %16 {strides = array<i32>} : memref<8x128xf32, #tpu.memory_space<vmem>>, vector<8x128xf32>,
    } else {
    }
    return
  }
  func.func @transform_0(%arg0: i32, %arg1: i32) -> (i32, i32) {
    %c0_i32 = arith.constant 0 : i32
    %c0_i32_0 = arith.constant 0 : i32
    return %arg0, %c0_i32 : i32, i32
  }
  func.func @transform_1(%arg0: i32, %arg1: i32) -> (i32, i32, i32) {
    %c0_i32 = arith.constant 0 : i32
    %c0_i32_0 = arith.constant 0 : i32
    %c0_i32_1 = arith.constant 0 : i32
    %c0_i32_2 = arith.constant 0 : i32
    return %c0_i32, %c0_i32_0, %c0_i32_1 : i32, i32, i32
  }
  func.func @transform_2(%arg0: i32, %arg1: i32) -> (i32, i32, i32) {
    %c0_i32 = arith.constant 0 : i32
    %c0_i32_0 = arith.constant 0 : i32
    %c0_i32_1 = arith.constant 0 : i32
    %c0_i32_2 = arith.constant 0 : i32
    return %c0_i32, %c0_i32_0, %c0_i32_1 : i32, i32, i32
  }
  func.func @transform_3(%arg0: i32, %arg1: i32) -> (i32, i32) {
    %c0_i32 = arith.constant 0 : i32
    %c0_i32_0 = arith.constant 0 : i32
    return %arg0, %c0_i32 : i32, i32
  }
}

</mosaic_0001>

<llo_original>
// kernel: tpu_custom_call.1
$region0: #{tpu_custom_call.1}
  #allocation0 [shape = 'u32[]', space=smem, size = 0x4, offset = 0x4, fixed_abs, tag = 'smem constant byte address 0x4 - core index']
  #allocation1 [shape = 'u32[72,128]{1,0:T(1,128)}', space=vmem, size = 0x9000, scoped, tag = 'internal scratch']
  #allocation2 [shape = 'f32[8,128]{1,0:T(8,128)}', space=vmem, size = 0x1000, scoped, tag = 'scratch operand']
  %s0 = inlined_call_operand.hbm [shape: f32[24,128], index: 0, kind: input, shape index: {}]
  %s1 = inlined_call_operand.hbm [shape: bf16[3,128,128], index: 1, kind: input, shape index: {}]
  %s2 = inlined_call_operand.hbm [shape: f32[3,1,128], index: 2, kind: input, shape index: {}]
  %s3 = inlined_call_operand.hbm [shape: f32[24,128], index: 3, kind: output, shape index: {}]
  %s4 = sld [smem:[#allocation0]]
  $region65: #{tpu_custom_call.1} parent=0
    _
  %s6 = ssub.s32 1, %s4
  %s7 = scalar_select 0, %s6, %s4
  $region1: #{tpu_custom_call.1} parent=0
    #allocation3 [shape = 'u8[8192]{0}', space=vmem, size = 0x2000, scoped, tag = 'input window, operand 0']
    #allocation4 [shape = 's32[2]{0}', space=sflag, size = 0x8, scoped, tag = 'scoped memory for tpu_custom_call.1']
    #allocation5 [shape = 's32[2]{0}', space=sflag, size = 0x8, scoped, tag = 'scoped memory for tpu_custom_call.1']
    #allocation6 [shape = 'u8[98304]{0}', space=vmem, size = 0x18000, scoped, tag = 'input window, operand 1, single buffered']
    #allocation7 [shape = 's32[1]{0}', space=sflag, size = 0x4, scoped, tag = 'scoped memory for tpu_custom_call.1']
    #allocation8 [shape = 'u8[1536]{0}', space=vmem, size = 0x800, scoped, tag = 'input window, operand 2, single buffered']
    #allocation9 [shape = 'u8[8192]{0}', space=vmem, size = 0x2000, scoped, tag = 'output window, operand 0']
    %8 = vsyncpa [#allocation4], 0
    %s9 = scalar_lea.sflag [#allocation4], 1
    %10 = vsyncpa %s9, 0
    %11 = vsyncpa [#allocation7], 0
    %12 = vsyncpa [#allocation5], 0
    %s13 = scalar_lea.sflag [#allocation5], 1
    %14 = vsyncpa %s13, 0
    loop: start=0, step=1, limit=11
    $region2: #{tpu_custom_call.1} parent=1 // loop_pre_header
      _
    $region3: #{tpu_custom_call.1} parent=1 // loop_header
      %s16 = sphi 0, %s20
      %p17 = scmp.ge.s32.totalorder %s16, 11
      %s23 = sphi 0, %s35
      %s24 = sphi 0, %s31
      %s25 = sphi 0, %s23
      %s26 = sphi 0, %s24
      %s27 = sphi 0, %s25
      %s28 = sphi 0, %s26
      %s38 = sphi 0, %s40
      %s41 = sphi 0, %s38
      %s42 = sphi 0, %s41
      %s58 = sphi 0, %s42
      %s62 = sphi 0, %s62
      %s64 = sphi 0, %s62
      %s65 = sphi 0, %s64
      %s79 = sphi 0, %s65
      %s83 = sphi 0, %s83
      %s85 = sphi 0, %s83
      %s86 = sphi 0, %s85
      %s100 = sphi 0, %s86
      %s106 = sphi 0, %s108
      %s109 = sphi 0, %s106
      %s110 = sphi 0, %s109
      %s126 = sphi 0, %s110
    $region4: #{tpu_custom_call.1} parent=1 // loop_header_branch
      %19 = sbr.rel (%p17) target = $region8
    $region5: #{tpu_custom_call.1} parent=1 // loop_body
      %s21 = ssub.s32 %s16, 1
      %s22 = ssub.s32 %s16, 2
      %s29 = sadd.s32 1, %s24
      %p30 = scmp.ge.s32.totalorder %s29, 3
      %s31 = scalar_select %p30, 0, %s29
      %s32 = sadd.s32 1, %s23
      %s33 = scalar_select %p30, %s32, %s23
      %p34 = scmp.ge.s32.totalorder %s33, 3
      %s35 = scalar_select %p34, 0, %s33
      %s36 = ssub.s32 %s23, %s35
      %p37 = scmp.eq.s32.totalorder %s36, 0
      %s39 = sadd.s32 %s38, 1
      %s40 = scalar_select %p37, %s38, %s39
      %p43 = pneg %p37
      %p44 = scmp.eq.s32.totalorder %s16, 8
      %p45 = por %p43, %p44
      %p46 = scmp.ne.s32.totalorder %s38, %s41
      %p47 = scmp.eq.s32.totalorder %s16, 0
      %p48 = por %p46, %p47
      %p49 = scmp.ne.s32.totalorder %s38, %s41
      %p50 = scmp.eq.s32.totalorder %s21, 8
      %p51 = por %p49, %p50
      %p52 = scmp.ne.s32.totalorder %s41, %s42
      %p53 = scmp.eq.s32.totalorder %s21, 0
      %p54 = por %p52, %p53
      %p55 = scmp.ne.s32.totalorder %s41, %s42
      %p56 = scmp.eq.s32.totalorder %s22, 8
      %p57 = por %p55, %p56
      %p59 = scmp.ne.s32.totalorder %s42, %s58
      %p60 = scmp.eq.s32.totalorder %s22, 0
      %p61 = por %p59, %p60
      %s63 = sadd.s32 %s62, 1
      %p66 = scmp.eq.s32.totalorder %s16, 8
      %p67 = scmp.ne.s32.totalorder %s62, %s64
      %p68 = scmp.eq.s32.totalorder %s16, 0
      %p69 = por %p67, %p68
      %p70 = scmp.ne.s32.totalorder %s62, %s64
      %p71 = scmp.eq.s32.totalorder %s21, 8
      %p72 = por %p70, %p71
      %p73 = scmp.ne.s32.totalorder %s64, %s65
      %p74 = scmp.eq.s32.totalorder %s21, 0
      %p75 = por %p73, %p74
      %p76 = scmp.ne.s32.totalorder %s64, %s65
      %p77 = scmp.eq.s32.totalorder %s22, 8
      %p78 = por %p76, %p77
      %p80 = scmp.ne.s32.totalorder %s65, %s79
      %p81 = scmp.eq.s32.totalorder %s22, 0
      %p82 = por %p80, %p81
      %s84 = sadd.s32 %s83, 1
      %p87 = scmp.eq.s32.totalorder %s16, 8
      %p88 = scmp.ne.s32.totalorder %s83, %s85
      %p89 = scmp.eq.s32.totalorder %s16, 0
      %p90 = por %p88, %p89
      %p91 = scmp.ne.s32.totalorder %s83, %s85
      %p92 = scmp.eq.s32.totalorder %s21, 8
      %p93 = por %p91, %p92
      %p94 = scmp.ne.s32.totalorder %s85, %s86
      %p95 = scmp.eq.s32.totalorder %s21, 0
      %p96 = por %p94, %p95
      %p97 = scmp.ne.s32.totalorder %s85, %s86
      %p98 = scmp.eq.s32.totalorder %s22, 8
      %p99 = por %p97, %p98
      %p101 = scmp.ne.s32.totalorder %s86, %s100
      %p102 = scmp.eq.s32.totalorder %s22, 0
      %p103 = por %p101, %p102
      %s104 = ssub.s32 %s23, %s35
      %p105 = scmp.eq.s32.totalorder %s104, 0
      %s107 = sadd.s32 %s106, 1
      %s108 = scalar_select %p105, %s106, %s107
      %p111 = pneg %p105
      %p112 = scmp.eq.s32.totalorder %s16, 8
      %p113 = por %p111, %p112
      %p114 = scmp.ne.s32.totalorder %s106, %s109
      %p115 = scmp.eq.s32.totalorder %s16, 0
      %p116 = por %p114, %p115
      %p117 = scmp.ne.s32.totalorder %s106, %s109
      %p118 = scmp.eq.s32.totalorder %s21, 8
      %p119 = por %p117, %p118
      %p120 = scmp.ne.s32.totalorder %s109, %s110
      %p121 = scmp.eq.s32.totalorder %s21, 0
      %p122 = por %p120, %p121
      %p123 = scmp.ne.s32.totalorder %s109, %s110
      %p124 = scmp.eq.s32.totalorder %s22, 8
      %p125 = por %p123, %p124
      %p127 = scmp.ne.s32.totalorder %s110, %s126
      %p128 = scmp.eq.s32.totalorder %s22, 0
      %p129 = por %p127, %p128
      %p130 = scmp.le.s32.totalorder 1, %s16
      %p131 = scmp.lt.s32.totalorder %s16, 10
      %p132 = pnand %p130, %p131
      %p133 = pneg %p132
      // Predicated region
      $region9: #{tpu_custom_call.1} parent=5 // pred_check
        _
      $region10: #{tpu_custom_call.1} parent=5 // pred_check_branch
        %135 = sbr.rel (%p132) target = $region12
      $region11: #{tpu_custom_call.1} parent=5 // pred_region
        %s136 = ssub.s32 %s16, 1
        // Predicated region
        $region13: #{tpu_custom_call.1} parent=11 // pred_check
          %p137 = pneg %p75
        $region14: #{tpu_custom_call.1} parent=11 // pred_check_branch
          %139 = sbr.rel (%p137) target = $region16
        $region15: #{tpu_custom_call.1} parent=11 // pred_region
          %141 = vsyncadd [#allocation7], 0
          %s142 = sshll.u32 %s1, 4
          %s143 = int_to_ptr.hbm [resolvable:$true] %s142
          %s144 = sshll.u32 [#allocation6], 4
          %s145 = int_to_ptr.vmem [resolvable:$true] %s144
          %150 = dma.hbm_to_vmem [thread:$0]  %s143, 3072, %s145, [#allocation7], 64, 64, 4
        $region16: #{tpu_custom_call.1} parent=11 // pred_fallthru
          _
        // Predicated region
        $region17: #{tpu_custom_call.1} parent=11 // pred_check
          %p151 = pneg %p96
        $region18: #{tpu_custom_call.1} parent=11 // pred_check_branch
          %153 = sbr.rel (%p151) target = $region20
        $region19: #{tpu_custom_call.1} parent=11 // pred_region
          %155 = vsyncadd [#allocation7], 0
          %s156 = sshll.u32 %s2, 4
          %s157 = int_to_ptr.hbm [resolvable:$true] %s156
          %s158 = sshll.u32 [#allocation8], 4
          %s159 = int_to_ptr.vmem [resolvable:$true] %s158
          %164 = dma.hbm_to_vmem [thread:$0]  %s157, 48, %s159, [#allocation7], 16, 16, 1
        $region20: #{tpu_custom_call.1} parent=11 // pred_fallthru
          _
      $region12: #{tpu_custom_call.1} parent=5 // pred_fallthru
        _
      %p165 = scmp.lt.s32.totalorder %s16, 9
      // Predicated region
      $region21: #{tpu_custom_call.1} parent=5 // pred_check
        %p166 = pneg %p165
      $region22: #{tpu_custom_call.1} parent=5 // pred_check_branch
        %168 = sbr.rel (%p166) target = $region24
      $region23: #{tpu_custom_call.1} parent=5 // pred_region
        // Predicated region
        $region25: #{tpu_custom_call.1} parent=23 // pred_check
          %p169 = pneg %p48
        $region26: #{tpu_custom_call.1} parent=23 // pred_check_branch
          %171 = sbr.rel (%p169) target = $region28
        $region27: #{tpu_custom_call.1} parent=23 // pred_region
          %s172 = sand.u32 %s38, 1
          %s173 = scalar_lea.sflag [#allocation4], %s172
          %s174 = sand.u32 %s38, 1
          %s175 = smul.addr %s174, 8
          %s176 = scalar_lea.vmem [#allocation3], %s175
          %178 = vsyncadd %s173, 0
          %s179 = smul.addr %s23, 8
          %s180 = scalar_lea.hbm %s0, %s179
          %s182 = sshll.u32 %s180, 4
          %s183 = int_to_ptr.hbm [resolvable:$true] %s182
          %s184 = sshll.u32 %s176, 4
          %s185 = int_to_ptr.vmem [resolvable:$true] %s184
          %187 = dma.hbm_to_vmem [thread:$0]  %s183, 128, %s185, %s173
        $region28: #{tpu_custom_call.1} parent=23 // pred_fallthru
          _
      $region24: #{tpu_custom_call.1} parent=5 // pred_fallthru
        _
      %p188 = scmp.le.s32.totalorder 1, %s16
      %p189 = scmp.lt.s32.totalorder %s16, 10
      %p190 = pnand %p188, %p189
      %p191 = pneg %p190
      // Predicated region
      $region29: #{tpu_custom_call.1} parent=5 // pred_check
        _
      $region30: #{tpu_custom_call.1} parent=5 // pred_check_branch
        %193 = sbr.rel (%p190) target = $region32
      $region31: #{tpu_custom_call.1} parent=5 // pred_region
        %s194 = ssub.s32 %s16, 1
        %s195 = sand.u32 %s41, 1
        %s196 = scalar_lea.sflag [#allocation4], %s195
        %s197 = sand.u32 %s41, 1
        %s198 = smul.addr %s197, 8
        %s199 = scalar_lea.vmem [#allocation3], %s198
        // Predicated region
        $region33: #{tpu_custom_call.1} parent=31 // pred_check
          %p200 = pneg %p54
        $region34: #{tpu_custom_call.1} parent=31 // pred_check_branch
          %202 = sbr.rel (%p200) target = $region36
        $region35: #{tpu_custom_call.1} parent=31 // pred_region
          %204 = dma.done %s196, 128
        $region36: #{tpu_custom_call.1} parent=31 // pred_fallthru
          _
        // Predicated region
        $region37: #{tpu_custom_call.1} parent=31 // pred_check
          %p205 = pneg %p75
        $region38: #{tpu_custom_call.1} parent=31 // pred_check_branch
          %207 = sbr.rel (%p205) target = $region40
        $region39: #{tpu_custom_call.1} parent=31 // pred_region
          %209 = dma.done [#allocation7], 3072
        $region40: #{tpu_custom_call.1} parent=31 // pred_fallthru
          _
        // Predicated region
        $region41: #{tpu_custom_call.1} parent=31 // pred_check
          %p210 = pneg %p96
        $region42: #{tpu_custom_call.1} parent=31 // pred_check_branch
          %212 = sbr.rel (%p210) target = $region44
        $region43: #{tpu_custom_call.1} parent=31 // pred_region
          %214 = dma.done [#allocation7], 48
        $region44: #{tpu_custom_call.1} parent=31 // pred_fallthru
          _
        %s215 = sand.u32 %s41, 1
        %s216 = scalar_lea.sflag [#allocation4], %s215
        %s217 = sand.u32 %s41, 1
        %s218 = smul.addr %s217, 8
        %s219 = scalar_lea.vmem [#allocation3], %s218
        %p220 = pneg %p54
        %p221 = pneg %p51
        %p222 = pneg %p75
        %p223 = pneg %p72
        %p224 = pneg %p96
        %p225 = pneg %p93
        %p226 = pneg %p122
        %p227 = pneg %p119
        %s228 = sand.u32 %s109, 1
        %s229 = scalar_lea.sflag [#allocation5], %s228
        %s230 = sand.u32 %s109, 1
        %s231 = smul.addr %s230, 8
        %s232 = scalar_lea.vmem [#allocation9], %s231
        %v233 = vld [vmem:[%s199] sm:$0xff]
        %p234 = scmp.eq.s32.totalorder %s26, 0
        // Predicated region
        $region45: #{tpu_custom_call.1} parent=31 // pred_check
          %p235 = pneg %p234
        $region46: #{tpu_custom_call.1} parent=31 // pred_check_branch
          %237 = sbr.rel (%p235) target = $region48
        $region47: #{tpu_custom_call.1} parent=31 // pred_region
          %238 = vst [vmem:[#allocation2] sm:$0xff] %v233
        $region48: #{tpu_custom_call.1} parent=31 // pred_fallthru
          _
        %v239 = vld [vmem:[#allocation2] sm:$0xff]
        %s240 = smul.u32 %s26, 16
        %s241 = smul.addr %s240, 4
        %s242 = scalar_lea.vmem [#allocation6], %s241
        %v243 = vld [vmem:[%s242] sm:$0xf]
        %v244 = vld [vmem:[%s242 + $0x4] sm:$0xf]
        %v245 = vld [vmem:[%s242 + $0x8] sm:$0xf]
        %v246 = vld [vmem:[%s242 + $0xc] sm:$0xf]
        %v247 = vld [vmem:[%s242 + $0x10] sm:$0xf]
        %v248 = vld [vmem:[%s242 + $0x14] sm:$0xf]
        %v249 = vld [vmem:[%s242 + $0x18] sm:$0xf]
        %v250 = vld [vmem:[%s242 + $0x1c] sm:$0xf]
        %v251 = vld [vmem:[%s242 + $0x20] sm:$0xf]
        %v252 = vld [vmem:[%s242 + $0x24] sm:$0xf]
        %v253 = vld [vmem:[%s242 + $0x28] sm:$0xf]
        %v254 = vld [vmem:[%s242 + $0x2c] sm:$0xf]
        %v255 = vld [vmem:[%s242 + $0x30] sm:$0xf]
        %v256 = vld [vmem:[%s242 + $0x34] sm:$0xf]
        %v257 = vld [vmem:[%s242 + $0x38] sm:$0xf]
        %v258 = vld [vmem:[%s242 + $0x3c] sm:$0xf]
        %s259 = scalar_lea.vmem [#allocation8], %s26
        %v260 = vld [vmem:[%s259] sm:$0x1]
        %v261 = vpack.c.bf16 %v239, %v239
        %v263 = vperm.slane %v260, 0
        %v281 = vunpack.c.l.b16 %v243
        %v282 = vunpack.c.l.b16 %v244
        %v283 = vunpack.c.l.b16 %v245
        %v284 = vunpack.c.l.b16 %v246
        %v285 = vunpack.c.l.b16 %v247
        %v286 = vunpack.c.l.b16 %v248
        %v287 = vunpack.c.l.b16 %v249
        %v288 = vunpack.c.l.b16 %v250
        %v289 = vunpack.c.l.b16 %v251
        %v290 = vunpack.c.l.b16 %v252
        %v291 = vunpack.c.l.b16 %v253
        %v292 = vunpack.c.l.b16 %v254
        %v293 = vunpack.c.l.b16 %v255
        %v294 = vunpack.c.l.b16 %v256
        %v295 = vunpack.c.l.b16 %v257
        %v296 = vunpack.c.l.b16 %v258
        %v297 = vpack.c.b16 %v282, %v281
        %v298 = vpack.c.b16 %v284, %v283
        %v299 = vpack.c.b16 %v286, %v285
        %v300 = vpack.c.b16 %v288, %v287
        %v301 = vpack.c.b16 %v290, %v289
        %v302 = vpack.c.b16 %v292, %v291
        %v303 = vpack.c.b16 %v294, %v293
        %v304 = vpack.c.b16 %v296, %v295
        %313 = vmatpush.bf16.msra.mxu0 %v304
        %314 = vmatpush.bf16.msra.mxu0 %v303
        %315 = vmatpush.bf16.msra.mxu0 %v302
        %316 = vmatpush.bf16.msra.mxu0 %v301
        %317 = vmatpush.bf16.msra.mxu0 %v300
        %318 = vmatpush.bf16.msra.mxu0 %v299
        %319 = vmatpush.bf16.msra.mxu0 %v298
        %320 = vmatpush.bf16.msra.mxu0 %v297
        %321 = vmatmul.bf16.gmra.mxu0 %v261
        %v322 = vpop.f32.mrf.mxu0
        %v323 = vadd.f32 %v263, %v322
        %v324 = vpop.f32.mrf.mxu0
        %325 = vdwg.mxu0
        %v326 = vmul.f32 %v233, %v323
        %v327 = vadd.f32 %v239, %v326
        %328 = vst [vmem:[#allocation2] sm:$0xff] %v327
        %p329 = scmp.eq.s32.totalorder %s26, 2
        // Predicated region
        $region49: #{tpu_custom_call.1} parent=31 // pred_check
          %p330 = pneg %p329
        $region50: #{tpu_custom_call.1} parent=31 // pred_check_branch
          %332 = sbr.rel (%p330) target = $region52
        $region51: #{tpu_custom_call.1} parent=31 // pred_region
          %333 = vst [vmem:[%s232] sm:$0xff] %v327
        $region52: #{tpu_custom_call.1} parent=31 // pred_fallthru
          _
        %s334 = sand.u32 %s109, 1
        %s335 = scalar_lea.sflag [#allocation5], %s334
        %s336 = sand.u32 %s109, 1
        %s337 = smul.addr %s336, 8
        %s338 = scalar_lea.vmem [#allocation9], %s337
        // Predicated region
        $region53: #{tpu_custom_call.1} parent=31 // pred_check
          %p339 = pneg %p119
        $region54: #{tpu_custom_call.1} parent=31 // pred_check_branch
          %341 = sbr.rel (%p339) target = $region56
        $region55: #{tpu_custom_call.1} parent=31 // pred_region
          %343 = vsyncadd %s335, 0
          %s344 = smul.addr %s25, 8
          %s345 = scalar_lea.hbm %s3, %s344
          %s347 = sshll.u32 %s338, 4
          %s348 = int_to_ptr.vmem [resolvable:$true] %s347
          %s349 = sshll.u32 %s345, 4
          %s350 = int_to_ptr.hbm [resolvable:$true] %s349
          %352 = dma.vmem_to_hbm [thread:$0]  %s348, 128, %s350, %s335
        $region56: #{tpu_custom_call.1} parent=31 // pred_fallthru
          _
      $region32: #{tpu_custom_call.1} parent=5 // pred_fallthru
        _
      %p353 = scmp.le.s32.totalorder 2, %s16
      // Predicated region
      $region57: #{tpu_custom_call.1} parent=5 // pred_check
        %p354 = pneg %p353
      $region58: #{tpu_custom_call.1} parent=5 // pred_check_branch
        %356 = sbr.rel (%p354) target = $region60
      $region59: #{tpu_custom_call.1} parent=5 // pred_region
        %s357 = ssub.s32 %s16, 2
        // Predicated region
        $region61: #{tpu_custom_call.1} parent=59 // pred_check
          %p358 = pneg %p125
        $region62: #{tpu_custom_call.1} parent=59 // pred_check_branch
          %360 = sbr.rel (%p358) target = $region64
        $region63: #{tpu_custom_call.1} parent=59 // pred_region
          %s361 = sand.u32 %s110, 1
          %s362 = scalar_lea.sflag [#allocation5], %s361
          %s363 = sand.u32 %s110, 1
          %s364 = smul.addr %s363, 8
          %s365 = scalar_lea.vmem [#allocation9], %s364
          %367 = dma.done %s362, 128
        $region64: #{tpu_custom_call.1} parent=59 // pred_fallthru
          _
      $region60: #{tpu_custom_call.1} parent=5 // pred_fallthru
        _
    $region6: #{tpu_custom_call.1} parent=1 // loop_footer
      %s20 = sadd.s32 1, %s16
    $region7: #{tpu_custom_call.1} parent=1 // loop_footer_branch
      %15 = sbr.rel target = $region3
    $region8: #{tpu_custom_call.1} parent=1 // loop_exit
      _
    %368 = vsyncpa [#allocation4], 1
    %s369 = scalar_lea.sflag [#allocation4], 1
    %370 = vsyncpa %s369, 1
    %371 = vsyncpa [#allocation7], 1
    %372 = vsyncpa [#allocation5], 1
    %s373 = scalar_lea.sflag [#allocation5], 1
    %374 = vsyncpa %s373, 1

</llo_original>
